<compile_context>
chip_gen: v6e
topology: v6e:2x2x1
jax: 0.10.0
libtpu: 0.0.40
codegen_flags: <defaults>
</compile_context>

<pallas_src>
import jax
import jax.numpy as jnp
from jax.experimental import pallas as pl
from jax.experimental.pallas import tpu as pltpu


def _round_up(x, m):
    return ((x + m - 1) // m) * m


# ----------------------------------------------------------------------------
# Kernel bodies: relu(x@W1+b1) -> relu(.@W2+b2) -> tanh(.@W3+b3) [*scale+bias]
# ----------------------------------------------------------------------------
def _mlp_tanh(x_ref, w1_ref, b1_ref, w2_ref, b2_ref, w3_ref, b3_ref):
    """3-layer MLP, bf16 (or f32) MXU operands, f32 accumulation / activations."""
    wdt = w1_ref.dtype                       # bf16 (MXU-native) or f32
    x = x_ref[...].astype(wdt)                                        # (TB, in)
    h1 = jnp.maximum(
        jnp.dot(x, w1_ref[...], preferred_element_type=jnp.float32)
        + b1_ref[...], 0.0)                                           # (TB, Hp)
    h2 = jnp.maximum(
        jnp.dot(h1.astype(wdt), w2_ref[...],
                preferred_element_type=jnp.float32)
        + b2_ref[...], 0.0)                                           # (TB, Hp)
    z = jnp.dot(h2.astype(wdt), w3_ref[...],
                preferred_element_type=jnp.float32) + b3_ref[...]     # (TB, Ap)
    return jnp.tanh(z)


def _policy_kernel_plain(x_ref, w1_ref, b1_ref, w2_ref, b2_ref, w3_ref, b3_ref,
                         out_ref):
    # action_space is None -> action_scale = 1.0, action_bias = 0.0:
    # skip the two scale/bias operands (fewer DMA descriptors / VMEM buffers).
    out_ref[...] = _mlp_tanh(x_ref, w1_ref, b1_ref, w2_ref, b2_ref,
                             w3_ref, b3_ref)


def _policy_kernel_affine(x_ref, w1_ref, b1_ref, w2_ref, b2_ref, w3_ref, b3_ref,
                          scale_ref, bias_ref, out_ref):
    t = _mlp_tanh(x_ref, w1_ref, b1_ref, w2_ref, b2_ref, w3_ref, b3_ref)
    out_ref[...] = t * scale_ref[...] + bias_ref[...]


# ----------------------------------------------------------------------------
# One-time parameter preparation (hoisted out of the per-call path).
# ----------------------------------------------------------------------------
def prepare_params(params, use_bf16=True):
    """Pad hidden/action dims to lane multiples of 128 (lane-dense MXU tiles,
    unmasked output vst) and cast matmul weights to bf16.  Biases / scale /
    bias stay f32.  Returns (prepared_arrays, static_meta)."""
    num_inputs, hidden = params["w1"].shape
    num_actions = params["w3"].shape[1]
    hp = _round_up(hidden, 128)
    ap = _round_up(num_actions, 128)
    dh, da = hp - hidden, ap - num_actions
    wdt = jnp.bfloat16 if use_bf16 else jnp.float32

    prepared = {
        "w1": jnp.pad(params["w1"], ((0, 0), (0, dh))).astype(wdt),
        "b1": jnp.pad(params["b1"], ((0, 0), (0, dh))),
        "w2": jnp.pad(params["w2"], ((0, dh), (0, dh))).astype(wdt),
        "b2": jnp.pad(params["b2"], ((0, 0), (0, dh))),
        "w3": jnp.pad(params["w3"], ((0, dh), (0, da))).astype(wdt),
        "b3": jnp.pad(params["b3"], ((0, 0), (0, da))),
    }
    has_affine = "action_scale" in params
    if has_affine:
        prepared["scale"] = jnp.pad(params["action_scale"], ((0, 0), (0, da)))
        prepared["bias"] = jnp.pad(params["action_bias"], ((0, 0), (0, da)))

    meta = dict(num_inputs=num_inputs, num_actions=num_actions,
                hidden_pad=hp, actions_pad=ap, has_affine=has_affine)
    return prepared, meta


# ----------------------------------------------------------------------------
# Wrapper: batch tiling + pallas_call.
# ----------------------------------------------------------------------------
def _const_spec(shape, buffers=None):
    """Full-array block, constant index_map -> VMEM-resident across grid steps."""
    index_map = lambda i: (0,) * len(shape)
    if buffers is None:
        return pl.BlockSpec(shape, index_map)
    # Never-changing weight blocks: single-buffer to halve their VMEM footprint
    # (only engaged when the weights are big enough for it to matter).
    return pl.BlockSpec(shape, index_map, pipeline_mode=pl.Buffered(buffers))


def _pick_batch_tile(batch):
    # v5e/v6e: one TensorCore -> fewer, bigger tiles amortize the ~0.35 us
    # per-grid-step overhead.  v7x: 2 TCs -> keep >=2 "parallel" steps once
    # B >= 256 so both cores get work.  Tiles are multiples of 8 (f32 sublane)
    # and, for real batches, of 128 (v5e 4x128 MXU alignment).
    if batch <= 128:
        return _round_up(max(batch, 1), 8)
    if batch <= 384:
        return 128
    return 256


def policy_forward(state, prepared, meta, return_padded=False):
    B, num_inputs = state.shape
    assert num_inputs == meta["num_inputs"]
    hp, ap = meta["hidden_pad"], meta["actions_pad"]

    tb = _pick_batch_tile(B)
    b_pad = _round_up(B, tb)

    x = state.astype(jnp.float32)
    if b_pad != B:
        x = jnp.pad(x, ((0, b_pad - B), (0, 0)))   # only remaining per-call pad

    operands = [prepared["w1"], prepared["b1"], prepared["w2"], prepared["b2"],
                prepared["w3"], prepared["b3"]]
    if meta["has_affine"]:
        operands += [prepared["scale"], prepared["bias"]]
        kernel = _policy_kernel_affine
    else:
        kernel = _policy_kernel_plain

    weight_bytes = sum(int(w.size) * w.dtype.itemsize for w in operands)
    wbuf = 1 if weight_bytes >= (4 << 20) else None   # Buffered(1) only if big

    in_specs = [pl.BlockSpec((tb, num_inputs), lambda i: (i, 0))]  # state tile
    in_specs += [_const_spec(w.shape, wbuf) for w in operands]

    # Advisory cost so XLA can schedule/overlap this small custom call.
    flops = 2 * b_pad * (num_inputs * hp + hp * hp + hp * ap)
    bytes_accessed = weight_bytes + x.size * 4 + b_pad * ap * 4
    cost = pl.CostEstimate(flops=flops, transcendentals=b_pad * ap,
                           bytes_accessed=bytes_accessed)

    # Explicit VMEM budget: generous margin over the true footprint, clamped
    # well under every generation's physical VMEM (v7x 64 MiB per TC).
    footprint = (2 * weight_bytes
                 + 2 * (tb * num_inputs + tb * ap) * 4   # double-buffered tiles
                 + 4 * tb * hp * 4)                       # intermediates slack
    vmem_limit = int(min(100 << 20, max(32 << 20, 4 * footprint)))

    out = pl.pallas_call(
        kernel,
        out_shape=jax.ShapeDtypeStruct((b_pad, ap), jnp.float32),
        grid=(b_pad // tb,),
        in_specs=in_specs,
        out_specs=pl.BlockSpec((tb, ap), lambda i: (i, 0)),
        compiler_params=pltpu.CompilerParams(
            dimension_semantics=("parallel",),
            vmem_limit_bytes=vmem_limit),
        cost_estimate=cost,
    )(x, *operands)

    if return_padded:
        return out                      # let the consumer fuse/defer the slice
    return out[:B, :meta["num_actions"]]


# ----------------------------------------------------------------------------
# Parameter construction matching the PyTorch module:
#   nn.Linear weights -> xavier_uniform_(gain=1), biases -> 0  (weights_init_)
#   action_space=None -> action_scale=1.0, action_bias=0.0 (python scalars)
# Weights stored pre-transposed as (in, out).
# ----------------------------------------------------------------------------
def init_params(key, num_inputs, num_actions, hidden_dim, action_space=None):
    def xavier(k, fan_in, fan_out):
        bound = float(jnp.sqrt(6.0 / (fan_in + fan_out)))
        return jax.random.uniform(k, (fan_in, fan_out), jnp.float32,
                                  -bound, bound)

    k1, k2, k3 = jax.random.split(key, 3)
    params = {
        "w1": xavier(k1, num_inputs, hidden_dim),
        "b1": jnp.zeros((1, hidden_dim), jnp.float32),
        "w2": xavier(k2, hidden_dim, hidden_dim),
        "b2": jnp.zeros((1, hidden_dim), jnp.float32),
        "w3": xavier(k3, hidden_dim, num_actions),
        "b3": jnp.zeros((1, num_actions), jnp.float32),
    }
    if action_space is not None:
        high, low = action_space
        high = jnp.asarray(high, jnp.float32).reshape(1, num_actions)
        low = jnp.asarray(low, jnp.float32).reshape(1, num_actions)
        params["action_scale"] = (high - low) / 2.0
        params["action_bias"] = (high + low) / 2.0
    return params


def policy_reference(state, params):
    """Pure-JAX f32 reference mirroring the PyTorch forward()."""
    h1 = jax.nn.relu(state @ params["w1"] + params["b1"])
    h2 = jax.nn.relu(h1 @ params["w2"] + params["b2"])
    mean = jnp.tanh(h2 @ params["w3"] + params["b3"])
    if "action_scale" in params:
        mean = mean * params["action_scale"] + params["action_bias"]
    return mean


if __name__ == "__main__":
    NUM_INPUTS = 4
    NUM_ACTIONS = 4
    HIDDEN_DIM = 32
    BATCH = 2

    key = jax.random.PRNGKey(0)
    key, k_state, k_p1, k_p2 = jax.random.split(key, 4)
    state = jax.random.normal(k_state, (BATCH, NUM_INPUTS), jnp.float32)

    # --- action_space=None path (scale=1, bias=0 -> reduced-operand kernel) ---
    params = init_params(k_p1, NUM_INPUTS, NUM_ACTIONS, HIDDEN_DIM)
    prepared, meta = prepare_params(params)            # one-time prep (hoisted)
    out = jax.block_until_ready(policy_forward(state, prepared, meta))
    ref = jax.block_until_ready(policy_reference(state, params))
    assert out.shape == (BATCH, NUM_ACTIONS), out.shape
    # bf16 MXU operands -> loosened tolerance vs. the f32 torch-parity ref.
    assert jnp.allclose(out, ref, atol=5e-2, rtol=5e-2), (out, ref)

    # --- bounded action_space path (affine kernel variant) -------------------
    high = 2.0 * jnp.ones((NUM_ACTIONS,), jnp.float32)
    low = -1.0 * jnp.ones((NUM_ACTIONS,), jnp.float32)
    params2 = init_params(k_p2, NUM_INPUTS, NUM_ACTIONS, HIDDEN_DIM,
                          action_space=(high, low))
    prepared2, meta2 = prepare_params(params2)
    out2 = jax.block_until_ready(policy_forward(state, prepared2, meta2))
    ref2 = jax.block_until_ready(policy_reference(state, params2))
    assert out2.shape == (BATCH, NUM_ACTIONS), out2.shape
    assert jnp.allclose(out2, ref2, atol=5e-2, rtol=5e-2), (out2, ref2)

    print("KERNEL_OK")
</pallas_src>

<mosaic_0001>
module attributes {stable_mosaic.version = 11 : i64} {
  func.func @_policy_kernel_plain(%arg0: i32, %arg1: memref<8x4xf32, #tpu.memory_space<vmem>>, %arg2: memref<4x128xbf16, #tpu.memory_space<vmem>>, %arg3: memref<1x128xf32, #tpu.memory_space<vmem>>, %arg4: memref<128x128xbf16, #tpu.memory_space<vmem>>, %arg5: memref<1x128xf32, #tpu.memory_space<vmem>>, %arg6: memref<128x128xbf16, #tpu.memory_space<vmem>>, %arg7: memref<1x128xf32, #tpu.memory_space<vmem>>, %arg8: memref<8x128xf32, #tpu.memory_space<vmem>>) attributes {dimension_semantics = [#tpu.dimension_semantics<parallel>], iteration_bounds = array<i64: 1>, scalar_prefetch = 0 : i64, scratch_operands = 0 : i64, tpu.core_type = #tpu.core_type<tc>, window_params = [{transform_indices = @transform_0, window_bounds = array<i64: 8, 4>}, {pipeline_mode = #tpu.pipeline_mode<synchronous>, transform_indices = @transform_1, window_bounds = array<i64: 4, 128>}, {pipeline_mode = #tpu.pipeline_mode<synchronous>, transform_indices = @transform_2, window_bounds = array<i64: 1, 128>}, {pipeline_mode = #tpu.pipeline_mode<synchronous>, transform_indices = @transform_3, window_bounds = array<i64: 128, 128>}, {pipeline_mode = #tpu.pipeline_mode<synchronous>, transform_indices = @transform_4, window_bounds = array<i64: 1, 128>}, {pipeline_mode = #tpu.pipeline_mode<synchronous>, transform_indices = @transform_5, window_bounds = array<i64: 128, 128>}, {pipeline_mode = #tpu.pipeline_mode<synchronous>, transform_indices = @transform_6, window_bounds = array<i64: 1, 128>}, {transform_indices = @transform_7, window_bounds = array<i64: 8, 128>}]} {
    %c0 = arith.constant 0 : index
    %c0_0 = arith.constant 0 : index
    %0 = vector.load %arg1[%c0, %c0_0] : memref<8x4xf32, #tpu.memory_space<vmem>>, vector<8x4xf32>
    %1 = arith.truncf %0 : vector<8x4xf32> to vector<8x4xbf16>
    %c0_1 = arith.constant 0 : index
    %c0_2 = arith.constant 0 : index
    %2 = vector.load %arg2[%c0_1, %c0_2] : memref<4x128xbf16, #tpu.memory_space<vmem>>, vector<4x128xbf16>
    %cst = arith.constant dense<0.000000e+00> : vector<8x128xf32>
    %3 = tpu.matmul %1, %2, %cst {dimension_numbers = #tpu.dot_dimension_numbers<[1], [0], [0], [1], [0, 0, 1, 1], [], []>} : vector<8x4xbf16>, vector<4x128xbf16>, vector<8x128xf32> -> vector<8x128xf32>
    %c0_3 = arith.constant 0 : index
    %c0_4 = arith.constant 0 : index
    %4 = vector.load %arg3[%c0_3, %c0_4] : memref<1x128xf32, #tpu.memory_space<vmem>>, vector<1x128xf32>
    %5 = vector.broadcast %4 : vector<1x128xf32> to vector<8x128xf32>
    %6 = arith.addf %3, %5 : vector<8x128xf32>
    %cst_5 = arith.constant 0.000000e+00 : f32
    %7 = vector.broadcast %cst_5 : f32 to vector<8x128xf32>
    %8 = arith.maximumf %6, %7 : vector<8x128xf32>
    %9 = arith.truncf %8 : vector<8x128xf32> to vector<8x128xbf16>
    %c0_6 = arith.constant 0 : index
    %c0_7 = arith.constant 0 : index
    %10 = vector.load %arg4[%c0_6, %c0_7] : memref<128x128xbf16, #tpu.memory_space<vmem>>, vector<128x128xbf16>
    %cst_8 = arith.constant dense<0.000000e+00> : vector<8x128xf32>
    %11 = tpu.matmul %9, %10, %cst_8 {dimension_numbers = #tpu.dot_dimension_numbers<[1], [0], [0], [1], [0, 0, 1, 1], [], []>} : vector<8x128xbf16>, vector<128x128xbf16>, vector<8x128xf32> -> vector<8x128xf32>
    %c0_9 = arith.constant 0 : index
    %c0_10 = arith.constant 0 : index
    %12 = vector.load %arg5[%c0_9, %c0_10] : memref<1x128xf32, #tpu.memory_space<vmem>>, vector<1x128xf32>
    %13 = vector.broadcast %12 : vector<1x128xf32> to vector<8x128xf32>
    %14 = arith.addf %11, %13 : vector<8x128xf32>
    %cst_11 = arith.constant 0.000000e+00 : f32
    %15 = vector.broadcast %cst_11 : f32 to vector<8x128xf32>
    %16 = arith.maximumf %14, %15 : vector<8x128xf32>
    %17 = arith.truncf %16 : vector<8x128xf32> to vector<8x128xbf16>
    %c0_12 = arith.constant 0 : index
    %c0_13 = arith.constant 0 : index
    %18 = vector.load %arg6[%c0_12, %c0_13] : memref<128x128xbf16, #tpu.memory_space<vmem>>, vector<128x128xbf16>
    %cst_14 = arith.constant dense<0.000000e+00> : vector<8x128xf32>
    %19 = tpu.matmul %17, %18, %cst_14 {dimension_numbers = #tpu.dot_dimension_numbers<[1], [0], [0], [1], [0, 0, 1, 1], [], []>} : vector<8x128xbf16>, vector<128x128xbf16>, vector<8x128xf32> -> vector<8x128xf32>
    %c0_15 = arith.constant 0 : index
    %c0_16 = arith.constant 0 : index
    %20 = vector.load %arg7[%c0_15, %c0_16] : memref<1x128xf32, #tpu.memory_space<vmem>>, vector<1x128xf32>
    %21 = vector.broadcast %20 : vector<1x128xf32> to vector<8x128xf32>
    %22 = arith.addf %19, %21 : vector<8x128xf32>
    %23 = math.tanh %22 : vector<8x128xf32>
    %c0_17 = arith.constant 0 : index
    %c0_18 = arith.constant 0 : index
    %24 = vector.load %arg8[%c0_17, %c0_18] : memref<8x128xf32, #tpu.memory_space<vmem>>, vector<8x128xf32>
    tpu.vector_store %arg8[%c0_17, %c0_18], %23 {strides = array<i32>} : memref<8x128xf32, #tpu.memory_space<vmem>>, vector<8x128xf32>,
    return
  }
  func.func @transform_0(%arg0: i32) -> (i32, i32) {
    %c0_i32 = arith.constant 0 : i32
    %c0_i32_0 = arith.constant 0 : i32
    return %arg0, %c0_i32 : i32, i32
  }
  func.func @transform_1(%arg0: i32) -> (i32, i32) {
    %c0_i32 = arith.constant 0 : i32
    %c0_i32_0 = arith.constant 0 : i32
    %c0_i32_1 = arith.constant 0 : i32
    return %c0_i32, %c0_i32_0 : i32, i32
  }
  func.func @transform_2(%arg0: i32) -> (i32, i32) {
    %c0_i32 = arith.constant 0 : i32
    %c0_i32_0 = arith.constant 0 : i32
    %c0_i32_1 = arith.constant 0 : i32
    return %c0_i32, %c0_i32_0 : i32, i32
  }
  func.func @transform_3(%arg0: i32) -> (i32, i32) {
    %c0_i32 = arith.constant 0 : i32
    %c0_i32_0 = arith.constant 0 : i32
    %c0_i32_1 = arith.constant 0 : i32
    return %c0_i32, %c0_i32_0 : i32, i32
  }
  func.func @transform_4(%arg0: i32) -> (i32, i32) {
    %c0_i32 = arith.constant 0 : i32
    %c0_i32_0 = arith.constant 0 : i32
    %c0_i32_1 = arith.constant 0 : i32
    return %c0_i32, %c0_i32_0 : i32, i32
  }
  func.func @transform_5(%arg0: i32) -> (i32, i32) {
    %c0_i32 = arith.constant 0 : i32
    %c0_i32_0 = arith.constant 0 : i32
    %c0_i32_1 = arith.constant 0 : i32
    return %c0_i32, %c0_i32_0 : i32, i32
  }
  func.func @transform_6(%arg0: i32) -> (i32, i32) {
    %c0_i32 = arith.constant 0 : i32
    %c0_i32_0 = arith.constant 0 : i32
    %c0_i32_1 = arith.constant 0 : i32
    return %c0_i32, %c0_i32_0 : i32, i32
  }
  func.func @transform_7(%arg0: i32) -> (i32, i32) {
    %c0_i32 = arith.constant 0 : i32
    %c0_i32_0 = arith.constant 0 : i32
    return %arg0, %c0_i32 : i32, i32
  }
}

</mosaic_0001>

<llo_original>
// kernel: tpu_custom_call.1
$region0: #{tpu_custom_call.1}
  #allocation0 [shape = 'u32[]', space=smem, size = 0x4, offset = 0x4, fixed_abs, tag = 'smem constant byte address 0x4 - core index']
  #allocation1 [shape = 'u32[144,128]{1,0:T(1,128)}', space=vmem, size = 0x12000, scoped, tag = 'internal scratch']
  %s0 = inlined_call_operand.vmem [shape: f32[8,4], index: 0, kind: input, shape index: {}]
  %s1 = inlined_call_operand.vmem [shape: bf16[4,128], index: 1, kind: input, shape index: {}]
  %s2 = inlined_call_operand.vmem [shape: f32[1,128], index: 2, kind: input, shape index: {}]
  %s3 = inlined_call_operand.hbm [shape: bf16[128,128], index: 3, kind: input, shape index: {}]
  %s4 = inlined_call_operand.vmem [shape: f32[1,128], index: 4, kind: input, shape index: {}]
  %s5 = inlined_call_operand.hbm [shape: bf16[128,128], index: 5, kind: input, shape index: {}]
  %s6 = inlined_call_operand.vmem [shape: f32[1,128], index: 6, kind: input, shape index: {}]
  %s7 = inlined_call_operand.hbm [shape: f32[8,128], index: 7, kind: output, shape index: {}]
  %s8 = sld [smem:[#allocation0]]
  $region46: #{tpu_custom_call.1} parent=0
    _
  %s10 = ssub.s32 1, %s8
  %s11 = scalar_select 0, %s10, %s8
  $region1: #{tpu_custom_call.1} parent=0
    #allocation2 [shape = 'u8[32768]{0}', space=vmem, size = 0x8000, scoped, tag = 'input window, operand 3, single buffered']
    #allocation3 [shape = 's32[1]{0}', space=sflag, size = 0x4, scoped, tag = 'scoped memory for tpu_custom_call.1']
    #allocation4 [shape = 's32[1]{0}', space=sflag, size = 0x4, scoped, tag = 'scoped memory for tpu_custom_call.1']
    #allocation5 [shape = 'u8[32768]{0}', space=vmem, size = 0x8000, scoped, tag = 'input window, operand 5, single buffered']
    #allocation6 [shape = 's32[1]{0}', space=sflag, size = 0x4, scoped, tag = 'scoped memory for tpu_custom_call.1']
    #allocation7 [shape = 'u8[4096]{0}', space=vmem, size = 0x1000, scoped, tag = 'output window, operand 0, single buffered']
    %12 = vsyncpa [#allocation3], 0
    %13 = vsyncpa [#allocation6], 0
    %14 = vsyncpa [#allocation4], 0
    // Predicated region
    $region2: #{tpu_custom_call.1} parent=1 // pred_check
      _
    $region3: #{tpu_custom_call.1} parent=1 // pred_check_branch
      %16 = sbr.rel (0) target = $region5
    $region4: #{tpu_custom_call.1} parent=1 // pred_region
      _
    $region5: #{tpu_custom_call.1} parent=1 // pred_fallthru
      _
    // Predicated region
    $region6: #{tpu_custom_call.1} parent=1 // pred_check
      _
    $region7: #{tpu_custom_call.1} parent=1 // pred_check_branch
      %18 = sbr.rel (0) target = $region9
    $region8: #{tpu_custom_call.1} parent=1 // pred_region
      _
    $region9: #{tpu_custom_call.1} parent=1 // pred_fallthru
      _
    // Predicated region
    $region10: #{tpu_custom_call.1} parent=1 // pred_check
      _
    $region11: #{tpu_custom_call.1} parent=1 // pred_check_branch
      %20 = sbr.rel (0) target = $region13
    $region12: #{tpu_custom_call.1} parent=1 // pred_region
      _
    $region13: #{tpu_custom_call.1} parent=1 // pred_fallthru
      _
    // Predicated region
    $region14: #{tpu_custom_call.1} parent=1 // pred_check
      _
    $region15: #{tpu_custom_call.1} parent=1 // pred_check_branch
      %22 = sbr.rel (0) target = $region17
    $region16: #{tpu_custom_call.1} parent=1 // pred_region
      %s24 = ssub.s32 1024, 1024
      %25 = vsyncadd [#allocation3], %s24
      %s26 = sshll.u32 [#allocation2], 4
      %s27 = int_to_ptr.vmem [resolvable:$true] %s26
      %32 = dma.hbm_to_vmem [thread:$0]  %s3, 1024, %s27, [#allocation3], 64, 64, 4
    $region17: #{tpu_custom_call.1} parent=1 // pred_fallthru
      _
    // Predicated region
    $region18: #{tpu_custom_call.1} parent=1 // pred_check
      _
    $region19: #{tpu_custom_call.1} parent=1 // pred_check_branch
      %34 = sbr.rel (0) target = $region21
    $region20: #{tpu_custom_call.1} parent=1 // pred_region
      _
    $region21: #{tpu_custom_call.1} parent=1 // pred_fallthru
      _
    // Predicated region
    $region22: #{tpu_custom_call.1} parent=1 // pred_check
      _
    $region23: #{tpu_custom_call.1} parent=1 // pred_check_branch
      %36 = sbr.rel (0) target = $region25
    $region24: #{tpu_custom_call.1} parent=1 // pred_region
      %s38 = ssub.s32 1024, 1024
      %39 = vsyncadd [#allocation6], %s38
      %s40 = sshll.u32 [#allocation5], 4
      %s41 = int_to_ptr.vmem [resolvable:$true] %s40
      %46 = dma.hbm_to_vmem [thread:$0]  %s5, 1024, %s41, [#allocation6], 64, 64, 4
    $region25: #{tpu_custom_call.1} parent=1 // pred_fallthru
      _
    // Predicated region
    $region26: #{tpu_custom_call.1} parent=1 // pred_check
      _
    $region27: #{tpu_custom_call.1} parent=1 // pred_check_branch
      %48 = sbr.rel (0) target = $region29
    $region28: #{tpu_custom_call.1} parent=1 // pred_region
      _
    $region29: #{tpu_custom_call.1} parent=1 // pred_fallthru
      _
    // Predicated region
    $region30: #{tpu_custom_call.1} parent=1 // pred_check
      _
    $region31: #{tpu_custom_call.1} parent=1 // pred_check_branch
      %50 = sbr.rel (0) target = $region33
    $region32: #{tpu_custom_call.1} parent=1 // pred_region
      %51 = dma.done [#allocation3], 1024
    $region33: #{tpu_custom_call.1} parent=1 // pred_fallthru
      _
    // Predicated region
    $region34: #{tpu_custom_call.1} parent=1 // pred_check
      _
    $region35: #{tpu_custom_call.1} parent=1 // pred_check_branch
      %53 = sbr.rel (0) target = $region37
    $region36: #{tpu_custom_call.1} parent=1 // pred_region
      %54 = dma.done [#allocation6], 1024
    $region37: #{tpu_custom_call.1} parent=1 // pred_fallthru
      _
    %v56 = vld [vmem:[%s0] sm:$0xff]
    %v57 = vpack.c.bf16 %v56, %v56
    %v58 = vld [vmem:[%s1] sm:$0x3]
    %v59 = vld [vmem:[%s2] sm:$0x1]
    %v61 = vlaneseq
    %v62 = vshrl.u32 %v61, 7
    %v63 = vsub.s32 0, %v62
    %v64 = vrot.slane %v59, %v63
    %vm66 = vcmask 31744
    %v68 = vsel %vm66, %v57, 0
    %vm70 = vcmask 1041408
    %v72 = vsel %vm70, %v58, 0
    %74 = vmatprep.subr.bf16.mxu0 0
    %75 = vmatpush1.bf16.msra.mxu0 0
    %76 = vmatprep.subr.bf16.mxu0 0
    %77 = vmatpush1.bf16.msra.mxu0 0
    %78 = vmatprep.subr.bf16.mxu0 0
    %79 = vmatpush1.bf16.msra.mxu0 0
    %80 = vmatprep.subr.bf16.mxu0 0
    %81 = vmatpush1.bf16.msra.mxu0 0
    %82 = vmatprep.subr.bf16.mxu0 0
    %83 = vmatpush1.bf16.msra.mxu0 0
    %84 = vmatprep.subr.bf16.mxu0 0
    %85 = vmatpush1.bf16.msra.mxu0 0
    %86 = vmatprep.subr.bf16.mxu0 0
    %87 = vmatpush1.bf16.msra.mxu0 0
    %88 = vmatprep.subr.bf16.mxu0 0
    %89 = vmatpush1.bf16.msra.mxu0 %v72
    %90 = vmatprep.subr.bf16.mxu0 0
    %91 = vmatpush2.bf16.msra.mxu0 0
    %92 = vmatprep.subr.bf16.mxu0 0
    %93 = vmatpush2.bf16.msra.mxu0 0
    %94 = vmatprep.subr.bf16.mxu0 0
    %95 = vmatpush2.bf16.msra.mxu0 0
    %96 = vmatprep.subr.bf16.mxu0 0
    %97 = vmatpush2.bf16.msra.mxu0 0
    %98 = vmatprep.subr.bf16.mxu0 0
    %99 = vmatpush2.bf16.msra.mxu0 0
    %100 = vmatprep.subr.bf16.mxu0 0
    %101 = vmatpush2.bf16.msra.mxu0 0
    %102 = vmatprep.subr.bf16.mxu0 0
    %103 = vmatpush2.bf16.msra.mxu0 0
    %104 = vmatprep.subr.bf16.mxu0 0
    %105 = vmatpush2.bf16.msra.mxu0 0
    %106 = vmatprep.mubr.bf16.mxu0 0
    %107 = vmatmul.mubr.bf16.gmra.mxu0 %v68
    %v108 = vpop.f32.mrf.mxu0
    %v109 = vadd.f32 %v64, %v108
    %v110 = vpop.f32.mrf.mxu0
    %v111 = vpop.f32.mrf.mxu0
    %v112 = vpop.f32.mrf.mxu0
    %113 = vdwg.mxu0
    %v114 = vmax.f32 %v109, 0.0
    %v115 = vpack.c.bf16 %v114, %v114
    %v116 = vld [vmem:[#allocation2] sm:$0xf]
    %v117 = vld [vmem:[#allocation2 + $0x4] sm:$0xf]
    %v118 = vld [vmem:[#allocation2 + $0x8] sm:$0xf]
    %v119 = vld [vmem:[#allocation2 + $0xc] sm:$0xf]
    %v120 = vld [vmem:[#allocation2 + $0x10] sm:$0xf]
    %v121 = vld [vmem:[#allocation2 + $0x14] sm:$0xf]
    %v122 = vld [vmem:[#allocation2 + $0x18] sm:$0xf]
    %v123 = vld [vmem:[#allocation2 + $0x1c] sm:$0xf]
    %v124 = vld [vmem:[#allocation2 + $0x20] sm:$0xf]
    %v125 = vld [vmem:[#allocation2 + $0x24] sm:$0xf]
    %v126 = vld [vmem:[#allocation2 + $0x28] sm:$0xf]
    %v127 = vld [vmem:[#allocation2 + $0x2c] sm:$0xf]
    %v128 = vld [vmem:[#allocation2 + $0x30] sm:$0xf]
    %v129 = vld [vmem:[#allocation2 + $0x34] sm:$0xf]
    %v130 = vld [vmem:[#allocation2 + $0x38] sm:$0xf]
    %v131 = vld [vmem:[#allocation2 + $0x3c] sm:$0xf]
    %v132 = vld [vmem:[%s4] sm:$0x1]
    %v134 = vlaneseq
    %v135 = vshrl.u32 %v134, 7
    %v136 = vsub.s32 0, %v135
    %v137 = vrot.slane %v132, %v136
    %v155 = vunpack.c.l.b16 %v116
    %v156 = vunpack.c.l.b16 %v117
    %v157 = vunpack.c.l.b16 %v118
    %v158 = vunpack.c.l.b16 %v119
    %v159 = vunpack.c.l.b16 %v120
    %v160 = vunpack.c.l.b16 %v121
    %v161 = vunpack.c.l.b16 %v122
    %v162 = vunpack.c.l.b16 %v123
    %v163 = vunpack.c.l.b16 %v124
    %v164 = vunpack.c.l.b16 %v125
    %v165 = vunpack.c.l.b16 %v126
    %v166 = vunpack.c.l.b16 %v127
    %v167 = vunpack.c.l.b16 %v128
    %v168 = vunpack.c.l.b16 %v129
    %v169 = vunpack.c.l.b16 %v130
    %v170 = vunpack.c.l.b16 %v131
    %v171 = vpack.c.b16 %v156, %v155
    %v172 = vpack.c.b16 %v158, %v157
    %v173 = vpack.c.b16 %v160, %v159
    %v174 = vpack.c.b16 %v162, %v161
    %v175 = vpack.c.b16 %v164, %v163
    %v176 = vpack.c.b16 %v166, %v165
    %v177 = vpack.c.b16 %v168, %v167
    %v178 = vpack.c.b16 %v170, %v169
    %187 = vmatprep.subr.bf16.mxu0 0
    %188 = vmatpush1.bf16.msra.mxu0 %v178
    %189 = vmatprep.subr.bf16.mxu0 0
    %190 = vmatpush1.bf16.msra.mxu0 %v177
    %191 = vmatprep.subr.bf16.mxu0 0
    %192 = vmatpush1.bf16.msra.mxu0 %v176
    %193 = vmatprep.subr.bf16.mxu0 0
    %194 = vmatpush1.bf16.msra.mxu0 %v175
    %195 = vmatprep.subr.bf16.mxu0 0
    %196 = vmatpush1.bf16.msra.mxu0 %v174
    %197 = vmatprep.subr.bf16.mxu0 0
    %198 = vmatpush1.bf16.msra.mxu0 %v173
    %199 = vmatprep.subr.bf16.mxu0 0
    %200 = vmatpush1.bf16.msra.mxu0 %v172
    %201 = vmatprep.subr.bf16.mxu0 0
    %202 = vmatpush1.bf16.msra.mxu0 %v171
    %203 = vmatprep.subr.bf16.mxu0 0
    %204 = vmatpush2.bf16.msra.mxu0 0
    %205 = vmatprep.subr.bf16.mxu0 0
    %206 = vmatpush2.bf16.msra.mxu0 0
    %207 = vmatprep.subr.bf16.mxu0 0
    %208 = vmatpush2.bf16.msra.mxu0 0
    %209 = vmatprep.subr.bf16.mxu0 0
    %210 = vmatpush2.bf16.msra.mxu0 0
    %211 = vmatprep.subr.bf16.mxu0 0
    %212 = vmatpush2.bf16.msra.mxu0 0
    %213 = vmatprep.subr.bf16.mxu0 0
    %214 = vmatpush2.bf16.msra.mxu0 0
    %215 = vmatprep.subr.bf16.mxu0 0
    %216 = vmatpush2.bf16.msra.mxu0 0
    %217 = vmatprep.subr.bf16.mxu0 0
    %218 = vmatpush2.bf16.msra.mxu0 0
    %219 = vmatprep.mubr.bf16.mxu0 0
    %220 = vmatmul.mubr.bf16.gmra.mxu0 %v115
    %v221 = vpop.f32.mrf.mxu0
    %v222 = vadd.f32 %v137, %v221
    %v223 = vpop.f32.mrf.mxu0
    %v224 = vpop.f32.mrf.mxu0
    %v225 = vpop.f32.mrf.mxu0
    %226 = vdwg.mxu0
    %v227 = vmax.f32 %v222, 0.0
    %v228 = vpack.c.bf16 %v227, %v227
    %v229 = vld [vmem:[#allocation5] sm:$0xf]
    %v230 = vld [vmem:[#allocation5 + $0x4] sm:$0xf]
    %v231 = vld [vmem:[#allocation5 + $0x8] sm:$0xf]
    %v232 = vld [vmem:[#allocation5 + $0xc] sm:$0xf]
    %v233 = vld [vmem:[#allocation5 + $0x10] sm:$0xf]
    %v234 = vld [vmem:[#allocation5 + $0x14] sm:$0xf]
    %v235 = vld [vmem:[#allocation5 + $0x18] sm:$0xf]
    %v236 = vld [vmem:[#allocation5 + $0x1c] sm:$0xf]
    %v237 = vld [vmem:[#allocation5 + $0x20] sm:$0xf]
    %v238 = vld [vmem:[#allocation5 + $0x24] sm:$0xf]
    %v239 = vld [vmem:[#allocation5 + $0x28] sm:$0xf]
    %v240 = vld [vmem:[#allocation5 + $0x2c] sm:$0xf]
    %v241 = vld [vmem:[#allocation5 + $0x30] sm:$0xf]
    %v242 = vld [vmem:[#allocation5 + $0x34] sm:$0xf]
    %v243 = vld [vmem:[#allocation5 + $0x38] sm:$0xf]
    %v244 = vld [vmem:[#allocation5 + $0x3c] sm:$0xf]
    %v245 = vld [vmem:[%s6] sm:$0x1]
    %v247 = vlaneseq
    %v248 = vshrl.u32 %v247, 7
    %v249 = vsub.s32 0, %v248
    %v250 = vrot.slane %v245, %v249
    %v268 = vunpack.c.l.b16 %v229
    %v269 = vunpack.c.l.b16 %v230
    %v270 = vunpack.c.l.b16 %v231
    %v271 = vunpack.c.l.b16 %v232
    %v272 = vunpack.c.l.b16 %v233
    %v273 = vunpack.c.l.b16 %v234
    %v274 = vunpack.c.l.b16 %v235
    %v275 = vunpack.c.l.b16 %v236
    %v276 = vunpack.c.l.b16 %v237
    %v277 = vunpack.c.l.b16 %v238
    %v278 = vunpack.c.l.b16 %v239
    %v279 = vunpack.c.l.b16 %v240
    %v280 = vunpack.c.l.b16 %v241
    %v281 = vunpack.c.l.b16 %v242
    %v282 = vunpack.c.l.b16 %v243
    %v283 = vunpack.c.l.b16 %v244
    %v284 = vpack.c.b16 %v269, %v268
    %v285 = vpack.c.b16 %v271, %v270
    %v286 = vpack.c.b16 %v273, %v272
    %v287 = vpack.c.b16 %v275, %v274
    %v288 = vpack.c.b16 %v277, %v276
    %v289 = vpack.c.b16 %v279, %v278
    %v290 = vpack.c.b16 %v281, %v280
    %v291 = vpack.c.b16 %v283, %v282
    %300 = vmatprep.subr.bf16.mxu0 0
    %301 = vmatpush1.bf16.msra.mxu0 %v291
    %302 = vmatprep.subr.bf16.mxu0 0
    %303 = vmatpush1.bf16.msra.mxu0 %v290
    %304 = vmatprep.subr.bf16.mxu0 0
    %305 = vmatpush1.bf16.msra.mxu0 %v289
    %306 = vmatprep.subr.bf16.mxu0 0
    %307 = vmatpush1.bf16.msra.mxu0 %v288
    %308 = vmatprep.subr.bf16.mxu0 0
    %309 = vmatpush1.bf16.msra.mxu0 %v287
    %310 = vmatprep.subr.bf16.mxu0 0
    %311 = vmatpush1.bf16.msra.mxu0 %v286
    %312 = vmatprep.subr.bf16.mxu0 0
    %313 = vmatpush1.bf16.msra.mxu0 %v285
    %314 = vmatprep.subr.bf16.mxu0 0
    %315 = vmatpush1.bf16.msra.mxu0 %v284
    %316 = vmatprep.subr.bf16.mxu0 0
    %317 = vmatpush2.bf16.msra.mxu0 0
    %318 = vmatprep.subr.bf16.mxu0 0
    %319 = vmatpush2.bf16.msra.mxu0 0
    %320 = vmatprep.subr.bf16.mxu0 0
    %321 = vmatpush2.bf16.msra.mxu0 0
    %322 = vmatprep.subr.bf16.mxu0 0
    %323 = vmatpush2.bf16.msra.mxu0 0
    %324 = vmatprep.subr.bf16.mxu0 0
    %325 = vmatpush2.bf16.msra.mxu0 0
    %326 = vmatprep.subr.bf16.mxu0 0
    %327 = vmatpush2.bf16.msra.mxu0 0
    %328 = vmatprep.subr.bf16.mxu0 0
    %329 = vmatpush2.bf16.msra.mxu0 0
    %330 = vmatprep.subr.bf16.mxu0 0
    %331 = vmatpush2.bf16.msra.mxu0 0
    %332 = vmatprep.mubr.bf16.mxu0 0
    %333 = vmatmul.mubr.bf16.gmra.mxu0 %v228
    %v334 = vpop.f32.mrf.mxu0
    %v335 = vadd.f32 %v250, %v334
    %v336 = vpop.f32.mrf.mxu0
    %v337 = vpop.f32.mrf.mxu0
    %v338 = vpop.f32.mrf.mxu0
    %339 = vdwg.mxu0
    %v340 = vtanh.pop %v335
    %341 = vst [vmem:[#allocation7] sm:$0xff] %v340
    // Predicated region
    $region38: #{tpu_custom_call.1} parent=1 // pred_check
      _
    $region39: #{tpu_custom_call.1} parent=1 // pred_check_branch
      %343 = sbr.rel (0) target = $region41
    $region40: #{tpu_custom_call.1} parent=1 // pred_region
      %s345 = ssub.s32 128, 128
      %346 = vsyncadd [#allocation4], %s345
      %s348 = sshll.u32 [#allocation7], 4
      %s349 = int_to_ptr.vmem [resolvable:$true] %s348
      %351 = dma.vmem_to_hbm [thread:$0]  %s349, 128, %s7, [#allocation4]
    $region41: #{tpu_custom_call.1} parent=1 // pred_fallthru
      _
    // Predicated region
    $region42: #{tpu_custom_call.1} parent=1 // pred_check
      _
    $region43: #{tpu_custom_call.1} parent=1 // pred_check_branch
      %353 = sbr.rel (0) target = $region45
    $region44: #{tpu_custom_call.1} parent=1 // pred_region
      %354 = dma.done [#allocation4], 128
    $region45: #{tpu_custom_call.1} parent=1 // pred_fallthru
      _
    %355 = vsyncpa [#allocation3], 1
    %356 = vsyncpa [#allocation6], 1
    %357 = vsyncpa [#allocation4], 1

</llo_original>
